<compile_context>
chip_gen: v7x
topology: tpu7x:2x2x1
jax: 0.10.0
libtpu: 0.0.40
codegen_flags: <defaults>
</compile_context>

<pallas_src>
import jax
import jax.numpy as jnp
from jax import lax
from jax.experimental import pallas as pl
from jax.experimental.pallas import tpu as pltpu


def projection_head_kernel(x_ref, w1_ref, b1_ref, w2_ref, b2_ref, w3_ref, b3_ref, o_ref):
    # x_ref block: (1, C_in, TL) -> (C_in, TL); channels on sublanes, spatial on lanes.
    x = x_ref[0]

    h = jnp.dot(w1_ref[...], x, preferred_element_type=jnp.float32) + b1_ref[...]
    h = jnp.maximum(h, 0.0)                                            # ReLU
    h = jnp.dot(w2_ref[...], h, preferred_element_type=jnp.float32) + b2_ref[...]
    h = jnp.maximum(h, 0.0)                                            # ReLU
    y = jnp.dot(w3_ref[...], h, preferred_element_type=jnp.float32) + b3_ref[...]

    # F.normalize(p=2, dim=channel): y / max(||y||_2, 1e-12)
    # == y * rsqrt(max(sum(y^2), 1e-24)); rsqrt goes to the EUP (otherwise idle).
    sumsq = jnp.sum(y * y, axis=0, keepdims=True)                      # (1, TL) sublane reduce
    inv = lax.rsqrt(jnp.maximum(sumsq, 1e-24))
    o_ref[0] = (y * inv).astype(o_ref.dtype)


def _pick_spatial_tile(hw, max_tile=2048):
    """Largest lane-dense (multiple-of-128) tile <= max_tile that divides H*W; else full extent."""
    if hw % 128 != 0:
        return hw  # full-extent block is always legal
    t = min(max_tile, hw)
    t = (t // 128) * 128
    while hw % t != 0:
        t -= 128
    return t


def projection_head_forward(x_nchw, params, *, max_tile=2048):
    """x_nchw: (N, C_in, H, W) float32. Returns (N, n_classes, H, W)."""
    w1, b1, w2, b2, w3, b3 = params
    N, C_in, H, W = x_nchw.shape
    HW = H * W
    n_hidden = w1.shape[1]
    n_classes = w3.shape[1]

    tl = _pick_spatial_tile(HW, max_tile)

    # NCHW is already (N, C, H*W): no transpose, just a reshape (free, layout-preserving).
    x3 = x_nchw.reshape(N, C_in, HW)

    # One-time tiny host-side transposes so the kernel computes W^T @ x.
    w1t = jnp.transpose(w1)            # (n_hidden, C_in)
    w2t = jnp.transpose(w2)            # (n_hidden, n_hidden)
    w3t = jnp.transpose(w3)            # (n_classes, n_hidden)
    b1c = b1.reshape(n_hidden, 1)
    b2c = b2.reshape(n_hidden, 1)
    b3c = b3.reshape(n_classes, 1)

    grid = (N, HW // tl)

    flops = 2 * N * HW * (C_in * n_hidden + n_hidden * n_hidden + n_hidden * n_classes)
    bytes_accessed = 4 * N * HW * (C_in + n_classes) + 4 * (
        w1t.size + w2t.size + w3t.size + n_hidden * 2 + n_classes
    )

    # NOTE: weights/biases have constant index_maps (resident operands); pipeline_mode=
    # pl.Buffered(1) would document that, but is skipped here since their VMEM cost is tiny.
    out = pl.pallas_call(
        projection_head_kernel,
        out_shape=jax.ShapeDtypeStruct((N, n_classes, HW), jnp.float32),
        grid_spec=pltpu.PrefetchScalarGridSpec(
            num_scalar_prefetch=0,
            grid=grid,
            in_specs=[
                pl.BlockSpec((1, C_in, tl), lambda n, j: (n, 0, j)),        # x tile
                pl.BlockSpec((n_hidden, C_in), lambda n, j: (0, 0)),        # W1^T
                pl.BlockSpec((n_hidden, 1), lambda n, j: (0, 0)),           # b1
                pl.BlockSpec((n_hidden, n_hidden), lambda n, j: (0, 0)),    # W2^T
                pl.BlockSpec((n_hidden, 1), lambda n, j: (0, 0)),           # b2
                pl.BlockSpec((n_classes, n_hidden), lambda n, j: (0, 0)),   # W3^T
                pl.BlockSpec((n_classes, 1), lambda n, j: (0, 0)),          # b3
            ],
            out_specs=pl.BlockSpec((1, n_classes, tl), lambda n, j: (n, 0, j)),
        ),
        compiler_params=pltpu.CompilerParams(
            dimension_semantics=("parallel", "parallel"),   # >=2 grid steps -> v7x megacore
            vmem_limit_bytes=32 * 1024 * 1024,              # tiles are tiny; stays well under v7x 64 MiB
        ),
        cost_estimate=pl.CostEstimate(
            flops=flops,
            transcendentals=N * HW,
            bytes_accessed=bytes_accessed,
        ),
    )(x3, w1t, b1c, w2t, b2c, w3t, b3c)

    return out.reshape(N, n_classes, H, W)


def init_params(key, n_input_channels, n_hidden_dims, n_classes):
    """Deterministic synthetic init (conv 1x1 kernels stored as (C_in, C_out) matmul weights)."""
    k1, k2, k3, k4, k5, k6 = jax.random.split(key, 6)
    w1 = jax.random.normal(k1, (n_input_channels, n_hidden_dims), jnp.float32) * 0.1
    b1 = jax.random.normal(k2, (n_hidden_dims,), jnp.float32) * 0.1
    w2 = jax.random.normal(k3, (n_hidden_dims, n_hidden_dims), jnp.float32) * 0.1
    b2 = jax.random.normal(k4, (n_hidden_dims,), jnp.float32) * 0.1
    w3 = jax.random.normal(k5, (n_hidden_dims, n_classes), jnp.float32) * 0.1
    b3 = jax.random.normal(k6, (n_classes,), jnp.float32) * 0.1
    return (w1, b1, w2, b2, w3, b3)


def reference_forward(x_nchw, params):
    """Plain-JAX reference matching the PyTorch module semantics (fp32)."""
    w1, b1, w2, b2, w3, b3 = params
    x = jnp.transpose(x_nchw, (0, 2, 3, 1))                 # NHWC
    h = jnp.maximum(x @ w1 + b1, 0.0)
    h = jnp.maximum(h @ w2 + b2, 0.0)
    y = h @ w3 + b3
    norm = jnp.sqrt(jnp.sum(y * y, axis=-1, keepdims=True))
    y = y / jnp.maximum(norm, 1e-12)
    return jnp.transpose(y, (0, 3, 1, 2))                   # NCHW


if __name__ == "__main__":
    # Small shapes consistent with the module: batch=2, channels=4, spatial=16x16
    N, C_in, H, W = 2, 4, 16, 16
    n_hidden, n_classes = 32, 8

    key = jax.random.PRNGKey(0)
    kx, kp = jax.random.split(key)
    x = jax.random.normal(kx, (N, C_in, H, W), jnp.float32)
    params = init_params(kp, C_in, n_hidden, n_classes)

    out = projection_head_forward(x, params)
    out = jax.block_until_ready(out)

    ref = reference_forward(x, params)
    assert out.shape == (N, n_classes, H, W)
    assert jnp.allclose(out, ref, atol=1e-5, rtol=1e-5), "mismatch vs reference"

    print("KERNEL_OK")
</pallas_src>

<mosaic_0001>
module attributes {stable_mosaic.version = 11 : i64} {
  func.func @projection_head_kernel(%arg0: i32, %arg1: i32, %arg2: memref<1x4x256xf32, #tpu.memory_space<vmem>>, %arg3: memref<32x4xf32, #tpu.memory_space<vmem>>, %arg4: memref<32x1xf32, #tpu.memory_space<vmem>>, %arg5: memref<32x32xf32, #tpu.memory_space<vmem>>, %arg6: memref<32x1xf32, #tpu.memory_space<vmem>>, %arg7: memref<8x32xf32, #tpu.memory_space<vmem>>, %arg8: memref<8x1xf32, #tpu.memory_space<vmem>>, %arg9: memref<1x8x256xf32, #tpu.memory_space<vmem>>) attributes {dimension_semantics = [#tpu.dimension_semantics<parallel>, #tpu.dimension_semantics<parallel>], iteration_bounds = array<i64: 2, 1>, scalar_prefetch = 0 : i64, scratch_operands = 0 : i64, tpu.core_type = #tpu.core_type<tc>, window_params = [{transform_indices = @transform_0, window_bounds = array<i64: 1, 4, 256>}, {pipeline_mode = #tpu.pipeline_mode<synchronous>, transform_indices = @transform_1, window_bounds = array<i64: 32, 4>}, {pipeline_mode = #tpu.pipeline_mode<synchronous>, transform_indices = @transform_2, window_bounds = array<i64: 32, 1>}, {pipeline_mode = #tpu.pipeline_mode<synchronous>, transform_indices = @transform_3, window_bounds = array<i64: 32, 32>}, {pipeline_mode = #tpu.pipeline_mode<synchronous>, transform_indices = @transform_4, window_bounds = array<i64: 32, 1>}, {pipeline_mode = #tpu.pipeline_mode<synchronous>, transform_indices = @transform_5, window_bounds = array<i64: 8, 32>}, {pipeline_mode = #tpu.pipeline_mode<synchronous>, transform_indices = @transform_6, window_bounds = array<i64: 8, 1>}, {transform_indices = @transform_7, window_bounds = array<i64: 1, 8, 256>}]} {
    %c0 = arith.constant 0 : index
    %c0_0 = arith.constant 0 : index
    %c0_1 = arith.constant 0 : index
    %0 = vector.load %arg2[%c0, %c0_0, %c0_1] : memref<1x4x256xf32, #tpu.memory_space<vmem>>, vector<1x4x256xf32>
    %1 = vector.shape_cast %0 : vector<1x4x256xf32> to vector<4x256xf32>
    %c0_2 = arith.constant 0 : index
    %c0_3 = arith.constant 0 : index
    %2 = vector.load %arg3[%c0_2, %c0_3] : memref<32x4xf32, #tpu.memory_space<vmem>>, vector<32x4xf32>
    %cst = arith.constant dense<0.000000e+00> : vector<32x256xf32>
    %3 = tpu.matmul %2, %1, %cst {dimension_numbers = #tpu.dot_dimension_numbers<[1], [0], [0], [1], [0, 0, 1, 1], [], []>} : vector<32x4xf32>, vector<4x256xf32>, vector<32x256xf32> -> vector<32x256xf32>
    %c0_4 = arith.constant 0 : index
    %c0_5 = arith.constant 0 : index
    %4 = vector.load %arg4[%c0_4, %c0_5] : memref<32x1xf32, #tpu.memory_space<vmem>>, vector<32x1xf32>
    %5 = vector.broadcast %4 : vector<32x1xf32> to vector<32x256xf32>
    %6 = arith.addf %3, %5 : vector<32x256xf32>
    %cst_6 = arith.constant 0.000000e+00 : f32
    %7 = vector.broadcast %cst_6 : f32 to vector<32x256xf32>
    %8 = arith.maximumf %6, %7 : vector<32x256xf32>
    %c0_7 = arith.constant 0 : index
    %c0_8 = arith.constant 0 : index
    %9 = vector.load %arg5[%c0_7, %c0_8] : memref<32x32xf32, #tpu.memory_space<vmem>>, vector<32x32xf32>
    %cst_9 = arith.constant dense<0.000000e+00> : vector<32x256xf32>
    %10 = tpu.matmul %9, %8, %cst_9 {dimension_numbers = #tpu.dot_dimension_numbers<[1], [0], [0], [1], [0, 0, 1, 1], [], []>} : vector<32x32xf32>, vector<32x256xf32>, vector<32x256xf32> -> vector<32x256xf32>
    %c0_10 = arith.constant 0 : index
    %c0_11 = arith.constant 0 : index
    %11 = vector.load %arg6[%c0_10, %c0_11] : memref<32x1xf32, #tpu.memory_space<vmem>>, vector<32x1xf32>
    %12 = vector.broadcast %11 : vector<32x1xf32> to vector<32x256xf32>
    %13 = arith.addf %10, %12 : vector<32x256xf32>
    %cst_12 = arith.constant 0.000000e+00 : f32
    %14 = vector.broadcast %cst_12 : f32 to vector<32x256xf32>
    %15 = arith.maximumf %13, %14 : vector<32x256xf32>
    %c0_13 = arith.constant 0 : index
    %c0_14 = arith.constant 0 : index
    %16 = vector.load %arg7[%c0_13, %c0_14] : memref<8x32xf32, #tpu.memory_space<vmem>>, vector<8x32xf32>
    %cst_15 = arith.constant dense<0.000000e+00> : vector<8x256xf32>
    %17 = tpu.matmul %16, %15, %cst_15 {dimension_numbers = #tpu.dot_dimension_numbers<[1], [0], [0], [1], [0, 0, 1, 1], [], []>} : vector<8x32xf32>, vector<32x256xf32>, vector<8x256xf32> -> vector<8x256xf32>
    %c0_16 = arith.constant 0 : index
    %c0_17 = arith.constant 0 : index
    %18 = vector.load %arg8[%c0_16, %c0_17] : memref<8x1xf32, #tpu.memory_space<vmem>>, vector<8x1xf32>
    %19 = vector.broadcast %18 : vector<8x1xf32> to vector<8x256xf32>
    %20 = arith.addf %17, %19 : vector<8x256xf32>
    %21 = arith.mulf %20, %20 : vector<8x256xf32>
    %cst_18 = arith.constant dense<0.000000e+00> : vector<256xf32>
    %22 = vector.multi_reduction <add>, %21, %cst_18 [0] : vector<8x256xf32> to vector<256xf32>
    %23 = vector.shape_cast %22 : vector<256xf32> to vector<1x256xf32>
    %cst_19 = arith.constant 1.000000e-24 : f32
    %24 = vector.broadcast %cst_19 : f32 to vector<1x256xf32>
    %25 = arith.maximumf %23, %24 : vector<1x256xf32>
    %26 = math.rsqrt %25 : vector<1x256xf32>
    %27 = vector.broadcast %26 : vector<1x256xf32> to vector<8x256xf32>
    %28 = arith.mulf %20, %27 : vector<8x256xf32>
    %c0_20 = arith.constant 0 : index
    %c0_21 = arith.constant 0 : index
    %c0_22 = arith.constant 0 : index
    %29 = vector.load %arg9[%c0_20, %c0_21, %c0_22] : memref<1x8x256xf32, #tpu.memory_space<vmem>>, vector<1x8x256xf32>
    %30 = vector.shape_cast %29 : vector<1x8x256xf32> to vector<8x256xf32>
    %31 = vector.shape_cast %28 : vector<8x256xf32> to vector<1x8x256xf32>
    tpu.vector_store %arg9[%c0_20, %c0_21, %c0_22], %31 {strides = array<i32>} : memref<1x8x256xf32, #tpu.memory_space<vmem>>, vector<1x8x256xf32>,
    return
  }
  func.func @transform_0(%arg0: i32, %arg1: i32) -> (i32, i32, i32) {
    %c0_i32 = arith.constant 0 : i32
    %c0_i32_0 = arith.constant 0 : i32
    return %arg0, %c0_i32, %arg1 : i32, i32, i32
  }
  func.func @transform_1(%arg0: i32, %arg1: i32) -> (i32, i32) {
    %c0_i32 = arith.constant 0 : i32
    %c0_i32_0 = arith.constant 0 : i32
    %c0_i32_1 = arith.constant 0 : i32
    return %c0_i32, %c0_i32_0 : i32, i32
  }
  func.func @transform_2(%arg0: i32, %arg1: i32) -> (i32, i32) {
    %c0_i32 = arith.constant 0 : i32
    %c0_i32_0 = arith.constant 0 : i32
    %c0_i32_1 = arith.constant 0 : i32
    return %c0_i32, %c0_i32_0 : i32, i32
  }
  func.func @transform_3(%arg0: i32, %arg1: i32) -> (i32, i32) {
    %c0_i32 = arith.constant 0 : i32
    %c0_i32_0 = arith.constant 0 : i32
    %c0_i32_1 = arith.constant 0 : i32
    return %c0_i32, %c0_i32_0 : i32, i32
  }
  func.func @transform_4(%arg0: i32, %arg1: i32) -> (i32, i32) {
    %c0_i32 = arith.constant 0 : i32
    %c0_i32_0 = arith.constant 0 : i32
    %c0_i32_1 = arith.constant 0 : i32
    return %c0_i32, %c0_i32_0 : i32, i32
  }
  func.func @transform_5(%arg0: i32, %arg1: i32) -> (i32, i32) {
    %c0_i32 = arith.constant 0 : i32
    %c0_i32_0 = arith.constant 0 : i32
    %c0_i32_1 = arith.constant 0 : i32
    return %c0_i32, %c0_i32_0 : i32, i32
  }
  func.func @transform_6(%arg0: i32, %arg1: i32) -> (i32, i32) {
    %c0_i32 = arith.constant 0 : i32
    %c0_i32_0 = arith.constant 0 : i32
    %c0_i32_1 = arith.constant 0 : i32
    return %c0_i32, %c0_i32_0 : i32, i32
  }
  func.func @transform_7(%arg0: i32, %arg1: i32) -> (i32, i32, i32) {
    %c0_i32 = arith.constant 0 : i32
    %c0_i32_0 = arith.constant 0 : i32
    return %arg0, %c0_i32, %arg1 : i32, i32, i32
  }
}

</mosaic_0001>

<llo_original>
// kernel: tpu_custom_call.1
$region0: #{tpu_custom_call.1}
  #allocation0 [shape = 'u32[]', space=smem, size = 0x4, offset = 0x4, fixed_abs, tag = 'smem constant byte address 0x4 - core index']
  #allocation1 [shape = 'u32[144,128]{1,0:T(1,128)}', space=vmem, size = 0x12000, scoped, tag = 'internal scratch']
  %s0 = inlined_call_operand.vmem [shape: f32[2,4,256], index: 0, kind: input, shape index: {}]
  %s1 = inlined_call_operand.vmem [shape: f32[32,4], index: 1, kind: input, shape index: {}]
  %s2 = inlined_call_operand.vmem [shape: f32[32,1], index: 2, kind: input, shape index: {}]
  %s3 = inlined_call_operand.vmem [shape: f32[32,32], index: 3, kind: input, shape index: {}]
  %s4 = inlined_call_operand.vmem [shape: f32[32,1], index: 4, kind: input, shape index: {}]
  %s5 = inlined_call_operand.vmem [shape: f32[8,32], index: 5, kind: input, shape index: {}]
  %s6 = inlined_call_operand.vmem [shape: f32[8,1], index: 6, kind: input, shape index: {}]
  %s7 = inlined_call_operand.hbm [shape: f32[2,8,256], index: 7, kind: output, shape index: {}]
  %s8 = sld [smem:[#allocation0]]
  $region61: #{tpu_custom_call.1} parent=0
    _
  %s10 = ssub.s32 1, %s8
  %s11 = scalar_select 0, %s10, %s8
  $region1: #{tpu_custom_call.1} parent=0
    #allocation2 [shape = 'u8[16384]{0}', space=vmem, size = 0x4000, scoped, tag = 'output window, operand 0']
    #allocation3 [shape = 's32[2]{0}', space=sflag, size = 0x8, scoped, tag = 'scoped memory for tpu_custom_call.1']
    %12 = vsyncpa [#allocation3], 0
    %s13 = scalar_lea.sflag [#allocation3], 1
    %14 = vsyncpa %s13, 0
    loop: start=0, step=1, limit=4
    $region2: #{tpu_custom_call.1} parent=1 // loop_pre_header
      _
    $region3: #{tpu_custom_call.1} parent=1 // loop_header
      %s16 = sphi 0, %s20
      %p17 = scmp.ge.s32.totalorder %s16, 4
      %s23 = sphi 0, %s35
      %s24 = sphi 0, %s31
      %s25 = sphi 0, %s23
      %s26 = sphi 0, %s24
      %s27 = sphi 0, %s25
      %s28 = sphi 0, %s26
      %s40 = sphi 0, %s42
      %s43 = sphi 0, %s40
      %s44 = sphi 0, %s43
      %s60 = sphi 0, %s44
      %s64 = sphi 0, %s64
      %s66 = sphi 0, %s64
      %s67 = sphi 0, %s66
      %s81 = sphi 0, %s67
      %s85 = sphi 0, %s85
      %s87 = sphi 0, %s85
      %s88 = sphi 0, %s87
      %s102 = sphi 0, %s88
      %s106 = sphi 0, %s106
      %s108 = sphi 0, %s106
      %s109 = sphi 0, %s108
      %s123 = sphi 0, %s109
      %s127 = sphi 0, %s127
      %s129 = sphi 0, %s127
      %s130 = sphi 0, %s129
      %s144 = sphi 0, %s130
      %s148 = sphi 0, %s148
      %s150 = sphi 0, %s148
      %s151 = sphi 0, %s150
      %s165 = sphi 0, %s151
      %s169 = sphi 0, %s169
      %s171 = sphi 0, %s169
      %s172 = sphi 0, %s171
      %s186 = sphi 0, %s172
      %s194 = sphi 0, %s196
      %s197 = sphi 0, %s194
      %s198 = sphi 0, %s197
      %s214 = sphi 0, %s198
    $region4: #{tpu_custom_call.1} parent=1 // loop_header_branch
      %19 = sbr.rel (%p17) target = $region8
    $region5: #{tpu_custom_call.1} parent=1 // loop_body
      %s21 = ssub.s32 %s16, 1
      %s22 = ssub.s32 %s16, 2
      %s29 = sadd.s32 1, %s24
      %p30 = scmp.ge.s32.totalorder %s29, 1
      %s31 = scalar_select %p30, 0, %s29
      %s32 = sadd.s32 1, %s23
      %s33 = scalar_select %p30, %s32, %s23
      %p34 = scmp.ge.s32.totalorder %s33, 2
      %s35 = scalar_select %p34, 0, %s33
      %s36 = ssub.s32 %s23, %s35
      %s37 = ssub.s32 %s24, %s31
      %s38 = sor.u32 %s36, %s37
      %p39 = scmp.eq.s32.totalorder %s38, 0
      %s41 = sadd.s32 %s40, 1
      %s42 = scalar_select %p39, %s40, %s41
      %p45 = pneg %p39
      %p46 = scmp.eq.s32.totalorder %s16, 1
      %p47 = por %p45, %p46
      %p48 = scmp.ne.s32.totalorder %s40, %s43
      %p49 = scmp.eq.s32.totalorder %s16, 0
      %p50 = por %p48, %p49
      %p51 = scmp.ne.s32.totalorder %s40, %s43
      %p52 = scmp.eq.s32.totalorder %s21, 1
      %p53 = por %p51, %p52
      %p54 = scmp.ne.s32.totalorder %s43, %s44
      %p55 = scmp.eq.s32.totalorder %s21, 0
      %p56 = por %p54, %p55
      %p57 = scmp.ne.s32.totalorder %s43, %s44
      %p58 = scmp.eq.s32.totalorder %s22, 1
      %p59 = por %p57, %p58
      %p61 = scmp.ne.s32.totalorder %s44, %s60
      %p62 = scmp.eq.s32.totalorder %s22, 0
      %p63 = por %p61, %p62
      %s65 = sadd.s32 %s64, 1
      %p68 = scmp.eq.s32.totalorder %s16, 1
      %p69 = scmp.ne.s32.totalorder %s64, %s66
      %p70 = scmp.eq.s32.totalorder %s16, 0
      %p71 = por %p69, %p70
      %p72 = scmp.ne.s32.totalorder %s64, %s66
      %p73 = scmp.eq.s32.totalorder %s21, 1
      %p74 = por %p72, %p73
      %p75 = scmp.ne.s32.totalorder %s66, %s67
      %p76 = scmp.eq.s32.totalorder %s21, 0
      %p77 = por %p75, %p76
      %p78 = scmp.ne.s32.totalorder %s66, %s67
      %p79 = scmp.eq.s32.totalorder %s22, 1
      %p80 = por %p78, %p79
      %p82 = scmp.ne.s32.totalorder %s67, %s81
      %p83 = scmp.eq.s32.totalorder %s22, 0
      %p84 = por %p82, %p83
      %s86 = sadd.s32 %s85, 1
      %p89 = scmp.eq.s32.totalorder %s16, 1
      %p90 = scmp.ne.s32.totalorder %s85, %s87
      %p91 = scmp.eq.s32.totalorder %s16, 0
      %p92 = por %p90, %p91
      %p93 = scmp.ne.s32.totalorder %s85, %s87
      %p94 = scmp.eq.s32.totalorder %s21, 1
      %p95 = por %p93, %p94
      %p96 = scmp.ne.s32.totalorder %s87, %s88
      %p97 = scmp.eq.s32.totalorder %s21, 0
      %p98 = por %p96, %p97
      %p99 = scmp.ne.s32.totalorder %s87, %s88
      %p100 = scmp.eq.s32.totalorder %s22, 1
      %p101 = por %p99, %p100
      %p103 = scmp.ne.s32.totalorder %s88, %s102
      %p104 = scmp.eq.s32.totalorder %s22, 0
      %p105 = por %p103, %p104
      %s107 = sadd.s32 %s106, 1
      %p110 = scmp.eq.s32.totalorder %s16, 1
      %p111 = scmp.ne.s32.totalorder %s106, %s108
      %p112 = scmp.eq.s32.totalorder %s16, 0
      %p113 = por %p111, %p112
      %p114 = scmp.ne.s32.totalorder %s106, %s108
      %p115 = scmp.eq.s32.totalorder %s21, 1
      %p116 = por %p114, %p115
      %p117 = scmp.ne.s32.totalorder %s108, %s109
      %p118 = scmp.eq.s32.totalorder %s21, 0
      %p119 = por %p117, %p118
      %p120 = scmp.ne.s32.totalorder %s108, %s109
      %p121 = scmp.eq.s32.totalorder %s22, 1
      %p122 = por %p120, %p121
      %p124 = scmp.ne.s32.totalorder %s109, %s123
      %p125 = scmp.eq.s32.totalorder %s22, 0
      %p126 = por %p124, %p125
      %s128 = sadd.s32 %s127, 1
      %p131 = scmp.eq.s32.totalorder %s16, 1
      %p132 = scmp.ne.s32.totalorder %s127, %s129
      %p133 = scmp.eq.s32.totalorder %s16, 0
      %p134 = por %p132, %p133
      %p135 = scmp.ne.s32.totalorder %s127, %s129
      %p136 = scmp.eq.s32.totalorder %s21, 1
      %p137 = por %p135, %p136
      %p138 = scmp.ne.s32.totalorder %s129, %s130
      %p139 = scmp.eq.s32.totalorder %s21, 0
      %p140 = por %p138, %p139
      %p141 = scmp.ne.s32.totalorder %s129, %s130
      %p142 = scmp.eq.s32.totalorder %s22, 1
      %p143 = por %p141, %p142
      %p145 = scmp.ne.s32.totalorder %s130, %s144
      %p146 = scmp.eq.s32.totalorder %s22, 0
      %p147 = por %p145, %p146
      %s149 = sadd.s32 %s148, 1
      %p152 = scmp.eq.s32.totalorder %s16, 1
      %p153 = scmp.ne.s32.totalorder %s148, %s150
      %p154 = scmp.eq.s32.totalorder %s16, 0
      %p155 = por %p153, %p154
      %p156 = scmp.ne.s32.totalorder %s148, %s150
      %p157 = scmp.eq.s32.totalorder %s21, 1
      %p158 = por %p156, %p157
      %p159 = scmp.ne.s32.totalorder %s150, %s151
      %p160 = scmp.eq.s32.totalorder %s21, 0
      %p161 = por %p159, %p160
      %p162 = scmp.ne.s32.totalorder %s150, %s151
      %p163 = scmp.eq.s32.totalorder %s22, 1
      %p164 = por %p162, %p163
      %p166 = scmp.ne.s32.totalorder %s151, %s165
      %p167 = scmp.eq.s32.totalorder %s22, 0
      %p168 = por %p166, %p167
      %s170 = sadd.s32 %s169, 1
      %p173 = scmp.eq.s32.totalorder %s16, 1
      %p174 = scmp.ne.s32.totalorder %s169, %s171
      %p175 = scmp.eq.s32.totalorder %s16, 0
      %p176 = por %p174, %p175
      %p177 = scmp.ne.s32.totalorder %s169, %s171
      %p178 = scmp.eq.s32.totalorder %s21, 1
      %p179 = por %p177, %p178
      %p180 = scmp.ne.s32.totalorder %s171, %s172
      %p181 = scmp.eq.s32.totalorder %s21, 0
      %p182 = por %p180, %p181
      %p183 = scmp.ne.s32.totalorder %s171, %s172
      %p184 = scmp.eq.s32.totalorder %s22, 1
      %p185 = por %p183, %p184
      %p187 = scmp.ne.s32.totalorder %s172, %s186
      %p188 = scmp.eq.s32.totalorder %s22, 0
      %p189 = por %p187, %p188
      %s190 = ssub.s32 %s23, %s35
      %s191 = ssub.s32 %s24, %s31
      %s192 = sor.u32 %s190, %s191
      %p193 = scmp.eq.s32.totalorder %s192, 0
      %s195 = sadd.s32 %s194, 1
      %s196 = scalar_select %p193, %s194, %s195
      %p199 = pneg %p193
      %p200 = scmp.eq.s32.totalorder %s16, 1
      %p201 = por %p199, %p200
      %p202 = scmp.ne.s32.totalorder %s194, %s197
      %p203 = scmp.eq.s32.totalorder %s16, 0
      %p204 = por %p202, %p203
      %p205 = scmp.ne.s32.totalorder %s194, %s197
      %p206 = scmp.eq.s32.totalorder %s21, 1
      %p207 = por %p205, %p206
      %p208 = scmp.ne.s32.totalorder %s197, %s198
      %p209 = scmp.eq.s32.totalorder %s21, 0
      %p210 = por %p208, %p209
      %p211 = scmp.ne.s32.totalorder %s197, %s198
      %p212 = scmp.eq.s32.totalorder %s22, 1
      %p213 = por %p211, %p212
      %p215 = scmp.ne.s32.totalorder %s198, %s214
      %p216 = scmp.eq.s32.totalorder %s22, 0
      %p217 = por %p215, %p216
      %p218 = scmp.le.s32.totalorder 1, %s16
      %p219 = scmp.lt.s32.totalorder %s16, 3
      %p220 = pnand %p218, %p219
      %p221 = pneg %p220
      // Predicated region
      $region9: #{tpu_custom_call.1} parent=5 // pred_check
        _
      $region10: #{tpu_custom_call.1} parent=5 // pred_check_branch
        %223 = sbr.rel (%p220) target = $region12
      $region11: #{tpu_custom_call.1} parent=5 // pred_region
        %s224 = ssub.s32 %s16, 1
        // Predicated region
        $region13: #{tpu_custom_call.1} parent=11 // pred_check
          %p225 = pneg %p77
        $region14: #{tpu_custom_call.1} parent=11 // pred_check_branch
          %227 = sbr.rel (%p225) target = $region16
        $region15: #{tpu_custom_call.1} parent=11 // pred_region
          _
        $region16: #{tpu_custom_call.1} parent=11 // pred_fallthru
          _
        // Predicated region
        $region17: #{tpu_custom_call.1} parent=11 // pred_check
          %p228 = pneg %p98
        $region18: #{tpu_custom_call.1} parent=11 // pred_check_branch
          %230 = sbr.rel (%p228) target = $region20
        $region19: #{tpu_custom_call.1} parent=11 // pred_region
          _
        $region20: #{tpu_custom_call.1} parent=11 // pred_fallthru
          _
        // Predicated region
        $region21: #{tpu_custom_call.1} parent=11 // pred_check
          %p231 = pneg %p119
        $region22: #{tpu_custom_call.1} parent=11 // pred_check_branch
          %233 = sbr.rel (%p231) target = $region24
        $region23: #{tpu_custom_call.1} parent=11 // pred_region
          _
        $region24: #{tpu_custom_call.1} parent=11 // pred_fallthru
          _
        // Predicated region
        $region25: #{tpu_custom_call.1} parent=11 // pred_check
          %p234 = pneg %p140
        $region26: #{tpu_custom_call.1} parent=11 // pred_check_branch
          %236 = sbr.rel (%p234) target = $region28
        $region27: #{tpu_custom_call.1} parent=11 // pred_region
          _
        $region28: #{tpu_custom_call.1} parent=11 // pred_fallthru
          _
        // Predicated region
        $region29: #{tpu_custom_call.1} parent=11 // pred_check
          %p237 = pneg %p161
        $region30: #{tpu_custom_call.1} parent=11 // pred_check_branch
          %239 = sbr.rel (%p237) target = $region32
        $region31: #{tpu_custom_call.1} parent=11 // pred_region
          _
        $region32: #{tpu_custom_call.1} parent=11 // pred_fallthru
          _
        // Predicated region
        $region33: #{tpu_custom_call.1} parent=11 // pred_check
          %p240 = pneg %p182
        $region34: #{tpu_custom_call.1} parent=11 // pred_check_branch
          %242 = sbr.rel (%p240) target = $region36
        $region35: #{tpu_custom_call.1} parent=11 // pred_region
          _
        $region36: #{tpu_custom_call.1} parent=11 // pred_fallthru
          _
      $region12: #{tpu_custom_call.1} parent=5 // pred_fallthru
        _
      %p243 = scmp.lt.s32.totalorder %s16, 2
      // Predicated region
      $region37: #{tpu_custom_call.1} parent=5 // pred_check
        %p244 = pneg %p243
      $region38: #{tpu_custom_call.1} parent=5 // pred_check_branch
        %246 = sbr.rel (%p244) target = $region40
      $region39: #{tpu_custom_call.1} parent=5 // pred_region
        // Predicated region
        $region41: #{tpu_custom_call.1} parent=39 // pred_check
          %p247 = pneg %p50
        $region42: #{tpu_custom_call.1} parent=39 // pred_check_branch
          %249 = sbr.rel (%p247) target = $region44
        $region43: #{tpu_custom_call.1} parent=39 // pred_region
          %s250 = smul.u32 2, %s24
          %p251 = scmp.lt.s32.totalorder %s23, 1
          %s252 = scalar_select %p251, %s23, 1
          %p253 = scmp.lt.s32.totalorder %s250, 1
          %s254 = scalar_select %p253, %s250, 1
          %s255 = smul.addr %s252, 2
          %s256 = sadd.s32 %s254, %s255
          %s257 = smul.addr %s256, 4
          %s258 = scalar_lea.vmem %s0, %s257
          %s259 = smul.u32 2, %s24
        $region44: #{tpu_custom_call.1} parent=39 // pred_fallthru
          _
      $region40: #{tpu_custom_call.1} parent=5 // pred_fallthru
        _
      %p260 = scmp.le.s32.totalorder 1, %s16
      %p261 = scmp.lt.s32.totalorder %s16, 3
      %p262 = pnand %p260, %p261
      %p263 = pneg %p262
      // Predicated region
      $region45: #{tpu_custom_call.1} parent=5 // pred_check
        _
      $region46: #{tpu_custom_call.1} parent=5 // pred_check_branch
        %265 = sbr.rel (%p262) target = $region48
      $region47: #{tpu_custom_call.1} parent=5 // pred_region
        %s266 = ssub.s32 %s16, 1
        %s267 = smul.u32 2, %s26
        %p268 = scmp.lt.s32.totalorder %s25, 1
        %s269 = scalar_select %p268, %s25, 1
        %p270 = scmp.lt.s32.totalorder %s267, 1
        %s271 = scalar_select %p270, %s267, 1
        %s272 = smul.addr %s269, 2
        %s273 = sadd.s32 %s271, %s272
        %s274 = smul.addr %s273, 4
        %s275 = scalar_lea.vmem %s0, %s274
        %p276 = pneg %p56
        %p277 = pneg %p53
        %p278 = pneg %p77
        %p279 = pneg %p74
        %p280 = pneg %p98
        %p281 = pneg %p95
        %p282 = pneg %p119
        %p283 = pneg %p116
        %p284 = pneg %p140
        %p285 = pneg %p137
        %p286 = pneg %p161
        %p287 = pneg %p158
        %p288 = pneg %p182
        %p289 = pneg %p179
        %p290 = pneg %p210
        %p291 = pneg %p207
        %s292 = sand.u32 %s197, 1
        %s293 = scalar_lea.sflag [#allocation3], %s292
        %s294 = sand.u32 %s197, 1
        %s295 = smul.addr %s294, 16
        %s296 = scalar_lea.vmem [#allocation2], %s295
        %s297 = smul.u32 2, %s26
        %p298 = scmp.lt.s32.totalorder %s25, 1
        %s299 = scalar_select %p298, %s25, 1
        %p300 = scmp.lt.s32.totalorder %s297, 1
        %s301 = scalar_select %p300, %s297, 1
        %s302 = smul.addr %s299, 2
        %s303 = sadd.s32 %s301, %s302
        %s304 = smul.addr %s303, 4
        %s305 = scalar_lea.vmem %s0, %s304
        %s306 = smul.u32 2, %s26
        %s307 = smul.u32 2, %s26
        %v308 = vld [vmem:[%s305] sm:$0xff]
        %v309 = vld [vmem:[%s1] sm:$0xff]
        %v310 = vld [vmem:[%s1 + $0x8] sm:$0xff]
        %v311 = vld [vmem:[%s1 + $0x10] sm:$0xff]
        %v312 = vld [vmem:[%s1 + $0x18] sm:$0xff]
        %v313 = vld [vmem:[%s2] sm:$0xff]
        %v314 = vld [vmem:[%s2 + $0x8] sm:$0xff]
        %v315 = vld [vmem:[%s2 + $0x10] sm:$0xff]
        %v316 = vld [vmem:[%s2 + $0x18] sm:$0xff]
        %318 = vset.pattern.permute.xlu0 0
        %319 = vperm.xlu0 %318, %v313
        %v320 = vpop.permute.xlu0 %319
        %323 = vset.pattern.permute.xlu0 0
        %324 = vperm.xlu0 %323, %v314
        %v325 = vpop.permute.xlu0 %324
        %328 = vset.pattern.permute.xlu0 0
        %329 = vperm.xlu0 %328, %v315
        %v330 = vpop.permute.xlu0 %329
        %333 = vset.pattern.permute.xlu0 0
        %334 = vperm.xlu0 %333, %v316
        %v335 = vpop.permute.xlu0 %334
        %v338 = vcombine.high %v308, %v308
        %vm339 = vcmask 31744
        %v341 = vsel %vm339, %v309, 0
        %v344 = vsel %vm339, %v310, 0
        %v347 = vsel %vm339, %v311, 0
        %v350 = vsel %vm339, %v312, 0
        %vm352 = vcmask 1043456
        %v353 = vsel %vm352, %v308, 0
        %v355 = vsel %vm352, %v338, 0
        %357 = vmatprep.subr.mxu0 %v355
        %358 = vmatpush1.msra.mxu0 %v353
        %359 = vmatprep.subr.mxu0 0.0
        %360 = vmatpush1.msra.mxu0 0.0
        %361 = vmatprep.subr.mxu0 0.0
        %362 = vmatpush1.msra.mxu0 0.0
        %363 = vmatprep.subr.mxu0 0.0
        %364 = vmatpush1.msra.mxu0 0.0
        %365 = vmatprep.subr.mxu0 0.0
        %366 = vmatpush1.msra.mxu0 0.0
        %367 = vmatprep.subr.mxu0 0.0
        %368 = vmatpush1.msra.mxu0 0.0
        %369 = vmatprep.subr.mxu0 0.0
        %370 = vmatpush1.msra.mxu0 0.0
        %371 = vmatprep.subr.mxu0 0.0
        %372 = vmatpush1.msra.mxu0 0.0
        %373 = vmatprep.subr.mxu0 0.0
        %374 = vmatpush1.msra.mxu0 0.0
        %375 = vmatprep.subr.mxu0 0.0
        %376 = vmatpush1.msra.mxu0 0.0
        %377 = vmatprep.subr.mxu0 0.0
        %378 = vmatpush1.msra.mxu0 0.0
        %379 = vmatprep.subr.mxu0 0.0
        %380 = vmatpush1.msra.mxu0 0.0
        %381 = vmatprep.subr.mxu0 0.0
        %382 = vmatpush1.msra.mxu0 0.0
        %383 = vmatprep.subr.mxu0 0.0
        %384 = vmatpush1.msra.mxu0 0.0
        %385 = vmatprep.subr.mxu0 0.0
        %386 = vmatpush1.msra.mxu0 0.0
        %387 = vmatprep.subr.mxu0 0.0
        %388 = vmatpush1.msra.mxu0 0.0
        %389 = vmatprep.subr.mxu0 0.0
        %390 = vmatpush1.msra.mxu0 0.0
        %391 = vmatprep.subr.mxu0 0.0
        %392 = vmatpush1.msra.mxu0 0.0
        %393 = vmatprep.subr.mxu0 0.0
        %394 = vmatpush1.msra.mxu0 0.0
        %395 = vmatprep.subr.mxu0 0.0
        %396 = vmatpush1.msra.mxu0 0.0
        %397 = vmatprep.subr.mxu0 0.0
        %398 = vmatpush1.msra.mxu0 0.0
        %399 = vmatprep.subr.mxu0 0.0
        %400 = vmatpush1.msra.mxu0 0.0
        %401 = vmatprep.subr.mxu0 0.0
        %402 = vmatpush1.msra.mxu0 0.0
        %403 = vmatprep.subr.mxu0 0.0
        %404 = vmatpush1.msra.mxu0 0.0
        %405 = vmatprep.subr.mxu0 0.0
        %406 = vmatpush1.msra.mxu0 0.0
        %407 = vmatprep.subr.mxu0 0.0
        %408 = vmatpush1.msra.mxu0 0.0
        %409 = vmatprep.subr.mxu0 0.0
        %410 = vmatpush1.msra.mxu0 0.0
        %411 = vmatprep.subr.mxu0 0.0
        %412 = vmatpush1.msra.mxu0 0.0
        %413 = vmatprep.subr.mxu0 0.0
        %414 = vmatpush1.msra.mxu0 0.0
        %415 = vmatprep.subr.mxu0 0.0
        %416 = vmatpush1.msra.mxu0 0.0
        %417 = vmatprep.subr.mxu0 0.0
        %418 = vmatpush1.msra.mxu0 0.0
        %419 = vmatprep.subr.mxu0 0.0
        %420 = vmatpush1.msra.mxu0 0.0
        %421 = vmatprep.mubr.f32.mxu0 0.0
        %422 = vmatmul.mubr.f32.gmra.mrb[0].mxu0 %v341
        %v423 = vpop.f32.mrb[0].mxu0
        %v424 = vadd.f32 %v320, %v423
        %v425 = vpop.f32.mrb[0].mxu0
        %v426 = vadd.f32 %v320, %v425
        %427 = vmatprep.mubr.f32.mxu0 0.0
        %428 = vmatmul.mubr.f32.gmra.mrb[0].mxu0 %v344
        %v429 = vpop.f32.mrb[0].mxu0
        %v430 = vadd.f32 %v325, %v429
        %v431 = vpop.f32.mrb[0].mxu0
        %v432 = vadd.f32 %v325, %v431
        %433 = vmatprep.mubr.f32.mxu0 0.0
        %434 = vmatmul.mubr.f32.gmra.mrb[0].mxu0 %v347
        %v435 = vpop.f32.mrb[0].mxu0
        %v436 = vadd.f32 %v330, %v435
        %v437 = vpop.f32.mrb[0].mxu0
        %v438 = vadd.f32 %v330, %v437
        %439 = vmatprep.mubr.f32.mxu0 0.0
        %440 = vmatmul.mubr.f32.gmra.mrb[0].mxu0 %v350
        %v441 = vpop.f32.mrb[0].mxu0
        %v442 = vadd.f32 %v335, %v441
        %v443 = vpop.f32.mrb[0].mxu0
        %v444 = vadd.f32 %v335, %v443
        %445 = vdwg.mxu0
        %v446 = vmax.f32 %v424, 0.0
        %v447 = vmax.f32 %v426, 0.0
        %v448 = vmax.f32 %v430, 0.0
        %v449 = vmax.f32 %v432, 0.0
        %v450 = vmax.f32 %v436, 0.0
        %v451 = vmax.f32 %v438, 0.0
        %v452 = vmax.f32 %v442, 0.0
        %v453 = vmax.f32 %v444, 0.0
        %v454 = vld [vmem:[%s3] sm:$0xff]
        %v455 = vld [vmem:[%s3 + $0x8] sm:$0xff]
        %v456 = vld [vmem:[%s3 + $0x10] sm:$0xff]
        %v457 = vld [vmem:[%s3 + $0x18] sm:$0xff]
        %v458 = vld [vmem:[%s4] sm:$0xff]
        %v459 = vld [vmem:[%s4 + $0x8] sm:$0xff]
        %v460 = vld [vmem:[%s4 + $0x10] sm:$0xff]
        %v461 = vld [vmem:[%s4 + $0x18] sm:$0xff]
        %463 = vset.pattern.permute.xlu0 0
        %464 = vperm.xlu0 %463, %v458
        %v465 = vpop.permute.xlu0 %464
        %468 = vset.pattern.permute.xlu0 0
        %469 = vperm.xlu0 %468, %v459
        %v470 = vpop.permute.xlu0 %469
        %473 = vset.pattern.permute.xlu0 0
        %474 = vperm.xlu0 %473, %v460
        %v475 = vpop.permute.xlu0 %474
        %478 = vset.pattern.permute.xlu0 0
        %479 = vperm.xlu0 %478, %v461
        %v480 = vpop.permute.xlu0 %479
        %vm482 = vcmask 261120
        %v484 = vsel %vm482, %v454, 0
        %v487 = vsel %vm482, %v455, 0
        %v490 = vsel %vm482, %v456, 0
        %v493 = vsel %vm482, %v457, 0
        %495 = vmatprep.subr.mxu0 %v447
        %496 = vmatpush1.msra.mxu0 %v446
        %497 = vmatprep.subr.mxu0 %v449
        %498 = vmatpush1.msra.mxu0 %v448
        %499 = vmatprep.subr.mxu0 %v451
        %500 = vmatpush1.msra.mxu0 %v450
        %501 = vmatprep.subr.mxu0 %v453
        %502 = vmatpush1.msra.mxu0 %v452
        %503 = vmatprep.subr.mxu0 0.0
        %504 = vmatpush1.msra.mxu0 0.0
        %505 = vmatprep.subr.mxu0 0.0
        %506 = vmatpush1.msra.mxu0 0.0
        %507 = vmatprep.subr.mxu0 0.0
        %508 = vmatpush1.msra.mxu0 0.0
        %509 = vmatprep.subr.mxu0 0.0
        %510 = vmatpush1.msra.mxu0 0.0
        %511 = vmatprep.subr.mxu0 0.0
        %512 = vmatpush1.msra.mxu0 0.0
        %513 = vmatprep.subr.mxu0 0.0
        %514 = vmatpush1.msra.mxu0 0.0
        %515 = vmatprep.subr.mxu0 0.0
        %516 = vmatpush1.msra.mxu0 0.0
        %517 = vmatprep.subr.mxu0 0.0
        %518 = vmatpush1.msra.mxu0 0.0
        %519 = vmatprep.subr.mxu0 0.0
        %520 = vmatpush1.msra.mxu0 0.0
        %521 = vmatprep.subr.mxu0 0.0
        %522 = vmatpush1.msra.mxu0 0.0
        %523 = vmatprep.subr.mxu0 0.0
        %524 = vmatpush1.msra.mxu0 0.0
        %525 = vmatprep.subr.mxu0 0.0
        %526 = vmatpush1.msra.mxu0 0.0
        %527 = vmatprep.subr.mxu0 0.0
        %528 = vmatpush1.msra.mxu0 0.0
        %529 = vmatprep.subr.mxu0 0.0
        %530 = vmatpush1.msra.mxu0 0.0
        %531 = vmatprep.subr.mxu0 0.0
        %532 = vmatpush1.msra.mxu0 0.0
        %533 = vmatprep.subr.mxu0 0.0
        %534 = vmatpush1.msra.mxu0 0.0
        %535 = vmatprep.subr.mxu0 0.0
        %536 = vmatpush1.msra.mxu0 0.0
        %537 = vmatprep.subr.mxu0 0.0
        %538 = vmatpush1.msra.mxu0 0.0
        %539 = vmatprep.subr.mxu0 0.0
        %540 = vmatpush1.msra.mxu0 0.0
        %541 = vmatprep.subr.mxu0 0.0
        %542 = vmatpush1.msra.mxu0 0.0
        %543 = vmatprep.subr.mxu0 0.0
        %544 = vmatpush1.msra.mxu0 0.0
        %545 = vmatprep.subr.mxu0 0.0
        %546 = vmatpush1.msra.mxu0 0.0
        %547 = vmatprep.subr.mxu0 0.0
        %548 = vmatpush1.msra.mxu0 0.0
        %549 = vmatprep.subr.mxu0 0.0
        %550 = vmatpush1.msra.mxu0 0.0
        %551 = vmatprep.subr.mxu0 0.0
        %552 = vmatpush1.msra.mxu0 0.0
        %553 = vmatprep.subr.mxu0 0.0
        %554 = vmatpush1.msra.mxu0 0.0
        %555 = vmatprep.subr.mxu0 0.0
        %556 = vmatpush1.msra.mxu0 0.0
        %557 = vmatprep.subr.mxu0 0.0
        %558 = vmatpush1.msra.mxu0 0.0
        %559 = vmatprep.mubr.f32.mxu0 0.0
        %560 = vmatmul.mubr.f32.gmra.mrb[0].mxu0 %v484
        %v561 = vpop.f32.mrb[0].mxu0
        %v562 = vadd.f32 %v465, %v561
        %v563 = vpop.f32.mrb[0].mxu0
        %v564 = vadd.f32 %v465, %v563
        %565 = vmatprep.mubr.f32.mxu0 0.0
        %566 = vmatmul.mubr.f32.gmra.mrb[0].mxu0 %v487
        %v567 = vpop.f32.mrb[0].mxu0
        %v568 = vadd.f32 %v470, %v567
        %v569 = vpop.f32.mrb[0].mxu0
        %v570 = vadd.f32 %v470, %v569
        %571 = vmatprep.mubr.f32.mxu0 0.0
        %572 = vmatmul.mubr.f32.gmra.mrb[0].mxu0 %v490
        %v573 = vpop.f32.mrb[0].mxu0
        %v574 = vadd.f32 %v475, %v573
        %v575 = vpop.f32.mrb[0].mxu0
        %v576 = vadd.f32 %v475, %v575
        %577 = vmatprep.mubr.f32.mxu0 0.0
        %578 = vmatmul.mubr.f32.gmra.mrb[0].mxu0 %v493
        %v579 = vpop.f32.mrb[0].mxu0
        %v580 = vadd.f32 %v480, %v579
        %v581 = vpop.f32.mrb[0].mxu0
        %v582 = vadd.f32 %v480, %v581
        %583 = vdwg.mxu0
        %v584 = vmax.f32 %v562, 0.0
        %v585 = vmax.f32 %v564, 0.0
        %v586 = vmax.f32 %v568, 0.0
        %v587 = vmax.f32 %v570, 0.0
        %v588 = vmax.f32 %v574, 0.0
        %v589 = vmax.f32 %v576, 0.0
        %v590 = vmax.f32 %v580, 0.0
        %v591 = vmax.f32 %v582, 0.0
        %v592 = vld [vmem:[%s5] sm:$0xff]
        %v593 = vld [vmem:[%s6] sm:$0xff]
        %595 = vset.pattern.permute.xlu0 0
        %596 = vperm.xlu0 %595, %v593
        %v597 = vpop.permute.xlu0 %596
        %v600 = vsel %vm482, %v592, 0
        %602 = vmatprep.subr.mxu0 %v585
        %603 = vmatpush1.msra.mxu0 %v584
        %604 = vmatprep.subr.mxu0 %v587
        %605 = vmatpush1.msra.mxu0 %v586
        %606 = vmatprep.subr.mxu0 %v589
        %607 = vmatpush1.msra.mxu0 %v588
        %608 = vmatprep.subr.mxu0 %v591
        %609 = vmatpush1.msra.mxu0 %v590
        %610 = vmatprep.subr.mxu0 0.0
        %611 = vmatpush1.msra.mxu0 0.0
        %612 = vmatprep.subr.mxu0 0.0
        %613 = vmatpush1.msra.mxu0 0.0
        %614 = vmatprep.subr.mxu0 0.0
        %615 = vmatpush1.msra.mxu0 0.0
        %616 = vmatprep.subr.mxu0 0.0
        %617 = vmatpush1.msra.mxu0 0.0
        %618 = vmatprep.subr.mxu0 0.0
        %619 = vmatpush1.msra.mxu0 0.0
        %620 = vmatprep.subr.mxu0 0.0
        %621 = vmatpush1.msra.mxu0 0.0
        %622 = vmatprep.subr.mxu0 0.0
        %623 = vmatpush1.msra.mxu0 0.0
        %624 = vmatprep.subr.mxu0 0.0
        %625 = vmatpush1.msra.mxu0 0.0
        %626 = vmatprep.subr.mxu0 0.0
        %627 = vmatpush1.msra.mxu0 0.0
        %628 = vmatprep.subr.mxu0 0.0
        %629 = vmatpush1.msra.mxu0 0.0
        %630 = vmatprep.subr.mxu0 0.0
        %631 = vmatpush1.msra.mxu0 0.0
        %632 = vmatprep.subr.mxu0 0.0
        %633 = vmatpush1.msra.mxu0 0.0
        %634 = vmatprep.subr.mxu0 0.0
        %635 = vmatpush1.msra.mxu0 0.0
        %636 = vmatprep.subr.mxu0 0.0
        %637 = vmatpush1.msra.mxu0 0.0
        %638 = vmatprep.subr.mxu0 0.0
        %639 = vmatpush1.msra.mxu0 0.0
        %640 = vmatprep.subr.mxu0 0.0
        %641 = vmatpush1.msra.mxu0 0.0
        %642 = vmatprep.subr.mxu0 0.0
        %643 = vmatpush1.msra.mxu0 0.0
        %644 = vmatprep.subr.mxu0 0.0
        %645 = vmatpush1.msra.mxu0 0.0
        %646 = vmatprep.subr.mxu0 0.0
        %647 = vmatpush1.msra.mxu0 0.0
        %648 = vmatprep.subr.mxu0 0.0
        %649 = vmatpush1.msra.mxu0 0.0
        %650 = vmatprep.subr.mxu0 0.0
        %651 = vmatpush1.msra.mxu0 0.0
        %652 = vmatprep.subr.mxu0 0.0
        %653 = vmatpush1.msra.mxu0 0.0
        %654 = vmatprep.subr.mxu0 0.0
        %655 = vmatpush1.msra.mxu0 0.0
        %656 = vmatprep.subr.mxu0 0.0
        %657 = vmatpush1.msra.mxu0 0.0
        %658 = vmatprep.subr.mxu0 0.0
        %659 = vmatpush1.msra.mxu0 0.0
        %660 = vmatprep.subr.mxu0 0.0
        %661 = vmatpush1.msra.mxu0 0.0
        %662 = vmatprep.subr.mxu0 0.0
        %663 = vmatpush1.msra.mxu0 0.0
        %664 = vmatprep.subr.mxu0 0.0
        %665 = vmatpush1.msra.mxu0 0.0
        %666 = vmatprep.mubr.f32.mxu0 0.0
        %667 = vmatmul.mubr.f32.gmra.mrb[0].mxu0 %v600
        %v668 = vpop.f32.mrb[0].mxu0
        %v669 = vadd.f32 %v597, %v668
        %v670 = vpop.f32.mrb[0].mxu0
        %v671 = vadd.f32 %v597, %v670
        %672 = vdwg.mxu0
        %v673 = vmul.f32 %v669, %v669
        %v674 = vmul.f32 %v671, %v671
        %v675 = vrot.slane %v673, 4
        %v676 = vadd.f32 %v673, %v675
        %v677 = vrot.slane %v676, 2
        %v678 = vadd.f32 %v676, %v677
        %v679 = vrot.slane %v678, 1
        %v680 = vadd.f32 %v678, %v679
        %v681 = vrot.slane %v674, 4
        %v682 = vadd.f32 %v674, %v681
        %v683 = vrot.slane %v682, 2
        %v684 = vadd.f32 %v682, %v683
        %v685 = vrot.slane %v684, 1
        %v686 = vadd.f32 %v684, %v685
        %v687 = vmax.f32 %v680, 1e-24
        %v688 = vmax.f32 %v686, 1e-24
        %v689 = vrsqrt.pop %v687
        %v690 = vrsqrt.pop %v688
        %v691 = vmul.f32 %v669, %v689
        %v692 = vmul.f32 %v671, %v690
        %693 = vst [vmem:[%s296] sm:$0xff] %v691
        %694 = vst [vmem:[%s296 + $0x8] sm:$0xff] %v692
        %s695 = sand.u32 %s197, 1
        %s696 = scalar_lea.sflag [#allocation3], %s695
        %s697 = sand.u32 %s197, 1
        %s698 = smul.addr %s697, 16
        %s699 = scalar_lea.vmem [#allocation2], %s698
        // Predicated region
        $region49: #{tpu_custom_call.1} parent=47 // pred_check
          %p700 = pneg %p207
        $region50: #{tpu_custom_call.1} parent=47 // pred_check_branch
          %702 = sbr.rel (%p700) target = $region52
        $region51: #{tpu_custom_call.1} parent=47 // pred_region
          %s703 = smul.u32 2, %s26
          %s705 = ssub.s32 256, 256
          %706 = vsyncadd %s696, %s705
          %s707 = smul.addr %s25, 2
          %s708 = sadd.s32 %s703, %s707
          %s709 = smul.addr %s708, 128
          %s710 = scalar_lea.hbm %s7, %s709
          %s712 = sshll.u32 %s699, 4
          %s713 = int_to_ptr.vmem [resolvable:$true] %s712
          %715 = dma.vmem_to_hbm [thread:$0]  %s713, 256, %s710, %s696
        $region52: #{tpu_custom_call.1} parent=47 // pred_fallthru
          _
      $region48: #{tpu_custom_call.1} parent=5 // pred_fallthru
        _
      %p716 = scmp.le.s32.totalorder 2, %s16
      // Predicated region
      $region53: #{tpu_custom_call.1} parent=5 // pred_check
        %p717 = pneg %p716
      $region54: #{tpu_custom_call.1} parent=5 // pred_check_branch
        %719 = sbr.rel (%p717) target = $region56
      $region55: #{tpu_custom_call.1} parent=5 // pred_region
        %s720 = ssub.s32 %s16, 2
        // Predicated region
        $region57: #{tpu_custom_call.1} parent=55 // pred_check
          %p721 = pneg %p213
        $region58: #{tpu_custom_call.1} parent=55 // pred_check_branch
          %723 = sbr.rel (%p721) target = $region60
        $region59: #{tpu_custom_call.1} parent=55 // pred_region
          %s724 = sand.u32 %s198, 1
          %s725 = scalar_lea.sflag [#allocation3], %s724
          %s726 = sand.u32 %s198, 1
          %s727 = smul.addr %s726, 16
          %s728 = scalar_lea.vmem [#allocation2], %s727
          %729 = dma.done %s725, 256
        $region60: #{tpu_custom_call.1} parent=55 // pred_fallthru
          _
      $region56: #{tpu_custom_call.1} parent=5 // pred_fallthru
        _
    $region6: #{tpu_custom_call.1} parent=1 // loop_footer
      %s20 = sadd.s32 1, %s16
    $region7: #{tpu_custom_call.1} parent=1 // loop_footer_branch
      %15 = sbr.rel target = $region3
    $region8: #{tpu_custom_call.1} parent=1 // loop_exit
      _
    %730 = vsyncpa [#allocation3], 1
    %s731 = scalar_lea.sflag [#allocation3], 1
    %732 = vsyncpa %s731, 1

</llo_original>
